<compile_context>
chip_gen: v7x
topology: tpu7x:2x2x1
jax: 0.10.0
libtpu: 0.0.40
codegen_flags: <defaults>
</compile_context>

<pallas_src>
import functools

import jax
import jax.numpy as jnp
import numpy as np
from jax.experimental import pallas as pl
from jax.experimental.pallas import tpu as pltpu


def _gnn_point_point_kernel(src_ref, dst_ref, w_ref, xr_ref, s_ref, bias_ref,
                            out_ref, acc_ref, *, n_edges, ragged,
                            fuse_bias_relu):
    """One grid step streams EB edges for one output partition.

    src_ref  : VMEM (EB, 1)   int32  source node ids (column)
    dst_ref  : VMEM (1, EB)   int32  target node ids (row)
    w_ref    : VMEM (EB, C)   f32    per-edge weight slab, C = P*Cin*Cout
    xr_ref   : VMEM (N, C)    bf16   node features pre-expanded across Cout
    s_ref    : VMEM (C, M)    f32    constant 0/1 Cin-reduction matrix, M=P*Cout
    bias_ref : VMEM (1, M)    f32    bias tiled across points
    out_ref  : VMEM (1, N, M) f32    per-partition output tile (written once)
    acc_ref  : VMEM (N, C)    f32    lane-dense resident accumulator (scratch)
    """
    c = pl.program_id(0)            # partition axis ("parallel")
    b = pl.program_id(1)            # edge-block axis ("arbitrary")
    nb = pl.num_programs(1)

    eb = src_ref.shape[0]
    n_nodes = xr_ref.shape[0]

    @pl.when(b == 0)
    def _init():
        acc_ref[...] = jnp.zeros_like(acc_ref)

    # Gather + Cout-expansion of source features as a 0/1 MXU matmul:
    #   xe[e, :] = xR[src[e], :]   (exact select of bf16 values, f32 result)
    node_ids_lanes = jax.lax.broadcasted_iota(jnp.int32, (eb, n_nodes), 1)
    onehot_src = (node_ids_lanes == src_ref[...]).astype(jnp.bfloat16)  # (EB, N)
    xe = jnp.dot(onehot_src, xr_ref[...],
                 preferred_element_type=jnp.float32)                    # (EB, C)

    # Per-edge products in f32 (weights streamed in native dtype, no copies).
    # (On v6e/v7x this pass could also run fully in bf16; it is not the
    #  bottleneck -- the kernel is HBM-bound on the weight stream.)
    prod = xe * w_ref[...].astype(jnp.float32)                          # (EB, C)

    if ragged:
        # Rows past E (partial last block / clamped duplicate blocks) may hold
        # garbage from the unpadded weight stream: kill them with a select
        # (NaN/Inf safe, unlike multiplying by a zero one-hot column).
        base = (c * nb + b) * eb
        e_ids = base + jax.lax.broadcasted_iota(jnp.int32, (eb, 1), 0)
        prod = jnp.where(e_ids < n_edges, prod, 0.0)

    # Scatter-add over dst as a one-hot matmul into the lane-dense accumulator:
    # bf16 operands (0/1 one-hot is exact), f32 accumulate.  Duplicate targets
    # sum correctly; masked rows contribute exactly zero.
    node_ids_subl = jax.lax.broadcasted_iota(jnp.int32, (n_nodes, eb), 0)
    onehot_dst = (node_ids_subl == dst_ref[...]).astype(jnp.bfloat16)   # (N, EB)
    acc_ref[...] += jnp.dot(onehot_dst, prod.astype(jnp.bfloat16),
                            preferred_element_type=jnp.float32)         # (N, C)

    @pl.when(b == nb - 1)
    def _finalize():
        # Cin reduction with the constant 0/1 matrix, once per partition.
        res = jnp.dot(acc_ref[...], s_ref[...],
                      preferred_element_type=jnp.float32)               # (N, M)
        if fuse_bias_relu:
            res = jnp.maximum(res + bias_ref[...], 0.0)
        out_ref[0] = res.astype(out_ref.dtype)


def custom_graph_conv_point_point(x, edge_index, edge_attr, weights_matrices,
                                  bias, *, edge_block=1024, num_partitions=1):
    """Forward pass of CustomGraphConvPointPoint.

    x               : (N, P, Cin) float
    edge_index      : (2, E) int  -- row 0 = source, row 1 = target
    edge_attr       : (E, nEdgeAttr) -- accepted for API parity, unused
                      (GNNpointPoint.message ignores it)
    weights_matrices: (E, P, Cin, Cout) float
    bias            : (Cout,) float
    edge_block      : edges streamed per grid step (rounded to 128; 512-1024
                      amortizes per-step overhead, prefer 1024 on v7x)
    num_partitions  : 1 on single-TC v5e/v6e (bias+ReLU fused in-kernel),
                      2 on dual-TC v7x (edge blocks shard across the cores)
    returns         : (N, P, Cout) float32
    """
    del edge_attr  # message() ignores it in the PyTorch module as well
    N, P, Cin = (int(d) for d in x.shape)
    E = int(edge_index.shape[1])
    Cout = int(weights_matrices.shape[-1])
    K = P * Cin          # flattened source-feature width
    C = K * Cout         # flattened weight-row width (lane axis of the stream)
    M = P * Cout         # flattened output-row width

    # bias per output lane m = p*Cout + o  ->  bias[o]
    bias_row = jnp.tile(bias.astype(jnp.float32), P).reshape(1, M)

    if E == 0:
        out = jax.nn.relu(jnp.zeros((N, M), jnp.float32) + bias_row)
        return out.reshape(N, P, Cout)

    # Edge-block size: multiple of 128 (lane-dense dst row, sublane-aligned
    # weight rows), clamped so tiny graphs use a single block.
    EB = max(128, (int(edge_block) // 128) * 128)
    EB = min(EB, ((E + 127) // 128) * 128)
    needed = pl.cdiv(E, EB)                        # edge blocks actually needed
    NPART = max(1, min(int(num_partitions), needed))
    nb = pl.cdiv(needed, NPART)                    # blocks per partition
    cover = NPART * nb * EB
    ragged = cover != E                            # any masked (garbage) rows?
    fuse = NPART == 1                              # bias+ReLU inside the kernel

    # Cheap per-edge id vectors (no copies of the big weight stream).
    src_col = edge_index[0].astype(jnp.int32).reshape(E, 1)
    dst_row = edge_index[1].astype(jnp.int32).reshape(1, E)
    w2d = weights_matrices.reshape(E, C)           # free reshape, native dtype

    # Node features pre-expanded across the Cout lanes (tiny: N*C elements):
    #   xR[n, (p*Cin+i)*Cout + o] = x[n, p, i]
    xr = jnp.repeat(x.reshape(N, K).astype(jnp.bfloat16), Cout, axis=1)

    # Constant 0/1 Cin-reduction matrix:  c=(p*Cin+i)*Cout+o  ->  m=p*Cout+o.
    c_ids = np.arange(C)
    m_ids = np.arange(M)
    c_to_m = (c_ids // (Cin * Cout)) * Cout + (c_ids % Cout)
    s_mat = jnp.asarray(c_to_m[:, None] == m_ids[None, :], dtype=jnp.float32)

    # Linear edge-block index; clamped so a DMA window never starts past the
    # array (duplicate blocks are neutralized by the in-kernel edge-id mask).
    if NPART * nb == needed:
        def eidx(c, b):
            return c * nb + b
    else:
        def eidx(c, b):
            return jnp.minimum(c * nb + b, needed - 1)

    grid_spec = pltpu.PrefetchScalarGridSpec(
        num_scalar_prefetch=0,
        grid=(NPART, nb),
        in_specs=[
            pl.BlockSpec((EB, 1), lambda c, b: (eidx(c, b), 0)),    # src ids
            pl.BlockSpec((1, EB), lambda c, b: (0, eidx(c, b))),    # dst ids
            pl.BlockSpec((EB, C), lambda c, b: (eidx(c, b), 0)),    # weights
            pl.BlockSpec((N, C), lambda c, b: (0, 0)),              # xR (const)
            pl.BlockSpec((C, M), lambda c, b: (0, 0)),              # S  (const)
            pl.BlockSpec((1, M), lambda c, b: (0, 0)),              # bias
        ],
        out_specs=pl.BlockSpec((1, N, M), lambda c, b: (c, 0, 0)),
        scratch_shapes=[pltpu.VMEM((N, C), jnp.float32)],
    )

    # VMEM budget (double-buffered streams + constants + intermediates), with
    # 2x headroom for Mosaic internal scratch, capped at 56 MiB so the request
    # is always safe on v7x (64 MiB/TC); v5e/v6e have 128 MiB so no clamp hurts.
    w_itemsize = int(jnp.dtype(w2d.dtype).itemsize)
    lane = 128
    stream_bytes = 2 * (EB * C * w_itemsize + EB * lane * 4 + 8 * EB * 4)
    const_bytes = 2 * (N * C * 2 + C * max(M, lane) * 4 + 8 * max(M, lane) * 4)
    interm_bytes = 3 * EB * C * 4 + 2 * EB * max(N, lane) * 4
    acc_out_bytes = N * C * 4 + 2 * max(N, 8) * max(M, lane) * 4
    vmem_needed = stream_bytes + const_bytes + interm_bytes + acc_out_bytes
    vmem_limit = int(min(56 * 2 ** 20, max(32 * 2 ** 20, 2 * vmem_needed)))

    cost = pl.CostEstimate(
        flops=int(NPART * nb * (4 * EB * N * C + EB * C)
                  + NPART * 2 * N * C * M),
        transcendentals=0,
        bytes_accessed=int(E * C * w_itemsize + E * 8 + N * C * 2
                           + C * M * 4 + NPART * N * M * 4),
    )

    kernel = functools.partial(_gnn_point_point_kernel, n_edges=E,
                               ragged=ragged, fuse_bias_relu=fuse)

    partials = pl.pallas_call(
        kernel,
        out_shape=jax.ShapeDtypeStruct((NPART, N, M), jnp.float32),
        grid_spec=grid_spec,
        compiler_params=pltpu.CompilerParams(
            dimension_semantics=("parallel", "arbitrary"),
            vmem_limit_bytes=vmem_limit),
        cost_estimate=cost,
    )(src_col, dst_row, w2d, xr, s_mat, bias_row)

    if fuse:
        out = partials[0]                          # bias + ReLU already applied
    else:
        out = jax.nn.relu(jnp.sum(partials, axis=0) + bias_row)
    return out.reshape(N, P, Cout)


def _reference(x, edge_index, weights_matrices, bias):
    """Plain-JAX reference (x rounded to bf16 exactly as the kernel streams it)."""
    src, dst = edge_index[0], edge_index[1]
    xr = x.astype(jnp.bfloat16).astype(jnp.float32)
    x_j = xr[src]                                                   # (E, P, Cin)
    msg = jnp.einsum("bij,bijk->bik", x_j,
                     weights_matrices.astype(jnp.float32))          # (E, P, Cout)
    aggr = jax.ops.segment_sum(msg, dst, num_segments=x.shape[0])   # (N, P, Cout)
    return jax.nn.relu(aggr + bias.astype(jnp.float32))


if __name__ == "__main__":
    N, P = 8, 4            # nodes, points-per-node
    Cin, Cout = 8, 16      # in_channels, out_channels
    nEdgeAttr = 3

    def make_inputs(key, n_edges):
        k1, k2, k3, k4, k5 = jax.random.split(key, 5)
        x = jax.random.normal(k1, (N, P, Cin), dtype=jnp.float32)
        edge_index = jax.random.randint(k2, (2, n_edges), 0, N, dtype=jnp.int32)
        edge_attr = jax.random.normal(k3, (n_edges, nEdgeAttr), dtype=jnp.float32)
        weights = jax.random.normal(k4, (n_edges, P, Cin, Cout), dtype=jnp.float32)
        bias = 0.1 * jax.random.normal(k5, (Cout,), dtype=jnp.float32)
        return x, edge_index, edge_attr, weights, bias

    def check(out, ref):
        # Tolerance scales with the aggregate magnitudes: only the per-edge
        # products are rounded to bf16 (streams kept f32, accumulation f32).
        scale = float(jnp.max(jnp.abs(ref))) + 1.0
        np.testing.assert_allclose(np.asarray(out), np.asarray(ref),
                                   rtol=2e-2, atol=2e-2 * scale)

    # Case 1: small E, single ragged block, fused bias+ReLU finalize (v5e/v6e).
    x, ei, ea, w, b = make_inputs(jax.random.PRNGKey(0), 12)
    out = custom_graph_conv_point_point(x, ei, ea, w, b)
    out = jax.block_until_ready(out)
    check(out, _reference(x, ei, w, b))

    # Case 2: multi-block, ragged last block, 2 partitions (v7x-style sharding).
    x, ei, ea, w, b = make_inputs(jax.random.PRNGKey(1), 300)
    out = custom_graph_conv_point_point(x, ei, ea, w, b,
                                        edge_block=128, num_partitions=2)
    out = jax.block_until_ready(out)
    check(out, _reference(x, ei, w, b))

    # Case 3: E an exact multiple of the edge block (mask-free fast path).
    x, ei, ea, w, b = make_inputs(jax.random.PRNGKey(2), 256)
    out = custom_graph_conv_point_point(x, ei, ea, w, b, edge_block=128)
    out = jax.block_until_ready(out)
    check(out, _reference(x, ei, w, b))

    print("KERNEL_OK")
</pallas_src>

<mosaic_0001>
module attributes {stable_mosaic.version = 11 : i64} {
  func.func @_gnn_point_point_kernel(%arg0: i32, %arg1: i32, %arg2: memref<128x1xi32, #tpu.memory_space<vmem>>, %arg3: memref<1x128xi32, #tpu.memory_space<vmem>>, %arg4: memref<128x512xf32, #tpu.memory_space<vmem>>, %arg5: memref<8x512xbf16, #tpu.memory_space<vmem>>, %arg6: memref<512x64xf32, #tpu.memory_space<vmem>>, %arg7: memref<1x64xf32, #tpu.memory_space<vmem>>, %arg8: memref<1x8x64xf32, #tpu.memory_space<vmem>>, %arg9: memref<8x512xf32, #tpu.memory_space<vmem>>) attributes {dimension_semantics = [#tpu.dimension_semantics<parallel>, #tpu.dimension_semantics<arbitrary>], iteration_bounds = array<i64: 1, 1>, scalar_prefetch = 0 : i64, scratch_operands = 1 : i64, tpu.core_type = #tpu.core_type<tc>, window_params = [{transform_indices = @transform_0, window_bounds = array<i64: 128, 1>}, {transform_indices = @transform_1, window_bounds = array<i64: 1, 128>}, {transform_indices = @transform_2, window_bounds = array<i64: 128, 512>}, {pipeline_mode = #tpu.pipeline_mode<synchronous>, transform_indices = @transform_3, window_bounds = array<i64: 8, 512>}, {pipeline_mode = #tpu.pipeline_mode<synchronous>, transform_indices = @transform_4, window_bounds = array<i64: 512, 64>}, {pipeline_mode = #tpu.pipeline_mode<synchronous>, transform_indices = @transform_5, window_bounds = array<i64: 1, 64>}, {transform_indices = @transform_6, window_bounds = array<i64: 1, 8, 64>}]} {
    %c0_i32 = arith.constant 0 : i32
    %0 = arith.cmpi eq, %arg1, %c0_i32 : i32
    %1 = arith.extui %0 : i1 to i32
    %c0_i32_0 = arith.constant 0 : i32
    %2 = arith.cmpi ne, %1, %c0_i32_0 : i32
    scf.if %2 {
      %cst_16 = arith.constant 0.000000e+00 : f32
      %41 = vector.broadcast %cst_16 : f32 to vector<8x512xf32>
      %c0_17 = arith.constant 0 : index
      %c0_18 = arith.constant 0 : index
      %42 = vector.load %arg9[%c0_17, %c0_18] : memref<8x512xf32, #tpu.memory_space<vmem>>, vector<8x512xf32>
      tpu.vector_store %arg9[%c0_17, %c0_18], %41 {strides = array<i32>} : memref<8x512xf32, #tpu.memory_space<vmem>>, vector<8x512xf32>,
    } else {
    }
    %3 = tpu.iota {dimensions = array<i32: 1>} : vector<128x8xi32>
    %c0 = arith.constant 0 : index
    %c0_1 = arith.constant 0 : index
    %4 = vector.load %arg2[%c0, %c0_1] : memref<128x1xi32, #tpu.memory_space<vmem>>, vector<128x1xi32>
    %5 = vector.broadcast %4 : vector<128x1xi32> to vector<128x8xi32>
    %6 = arith.cmpi eq, %3, %5 : vector<128x8xi32>
    %7 = arith.extui %6 : vector<128x8xi1> to vector<128x8xi32>
    %8 = arith.sitofp %7 : vector<128x8xi32> to vector<128x8xf32>
    %9 = arith.truncf %8 : vector<128x8xf32> to vector<128x8xbf16>
    %c0_2 = arith.constant 0 : index
    %c0_3 = arith.constant 0 : index
    %10 = vector.load %arg5[%c0_2, %c0_3] : memref<8x512xbf16, #tpu.memory_space<vmem>>, vector<8x512xbf16>
    %cst = arith.constant dense<0.000000e+00> : vector<128x512xf32>
    %11 = tpu.matmul %9, %10, %cst {dimension_numbers = #tpu.dot_dimension_numbers<[1], [0], [0], [1], [0, 0, 1, 1], [], []>} : vector<128x8xbf16>, vector<8x512xbf16>, vector<128x512xf32> -> vector<128x512xf32>
    %c0_4 = arith.constant 0 : index
    %c0_5 = arith.constant 0 : index
    %12 = vector.load %arg4[%c0_4, %c0_5] : memref<128x512xf32, #tpu.memory_space<vmem>>, vector<128x512xf32>
    %13 = arith.mulf %11, %12 : vector<128x512xf32>
    %c1_i32 = arith.constant 1 : i32
    %14 = arith.muli %arg0, %c1_i32 : i32
    %15 = arith.addi %14, %arg1 : i32
    %c128_i32 = arith.constant 128 : i32
    %16 = arith.muli %15, %c128_i32 : i32
    %17 = tpu.iota {dimensions = array<i32: 0>} : vector<128x1xi32>
    %18 = vector.broadcast %16 : i32 to vector<128x1xi32>
    %19 = arith.addi %18, %17 : vector<128x1xi32>
    %c12_i32 = arith.constant 12 : i32
    %20 = vector.broadcast %c12_i32 : i32 to vector<128x1xi32>
    %21 = arith.cmpi slt, %19, %20 : vector<128x1xi32>
    %cst_6 = arith.constant 0.000000e+00 : f32
    %22 = vector.shape_cast %21 : vector<128x1xi1> to vector<128x1xi1>
    %23 = vector.broadcast %22 : vector<128x1xi1> to vector<128x512xi1>
    %24 = vector.broadcast %cst_6 : f32 to vector<128x512xf32>
    %25 = arith.select %23, %13, %24 : vector<128x512xi1>, vector<128x512xf32>
    %26 = tpu.iota {dimensions = array<i32: 0>} : vector<8x128xi32>
    %c0_7 = arith.constant 0 : index
    %c0_8 = arith.constant 0 : index
    %27 = vector.load %arg3[%c0_7, %c0_8] : memref<1x128xi32, #tpu.memory_space<vmem>>, vector<1x128xi32>
    %28 = vector.broadcast %27 : vector<1x128xi32> to vector<8x128xi32>
    %29 = arith.cmpi eq, %26, %28 : vector<8x128xi32>
    %30 = arith.extui %29 : vector<8x128xi1> to vector<8x128xi32>
    %31 = arith.sitofp %30 : vector<8x128xi32> to vector<8x128xf32>
    %32 = arith.truncf %31 : vector<8x128xf32> to vector<8x128xbf16>
    %c0_9 = arith.constant 0 : index
    %c0_10 = arith.constant 0 : index
    %33 = vector.load %arg9[%c0_9, %c0_10] : memref<8x512xf32, #tpu.memory_space<vmem>>, vector<8x512xf32>
    %34 = arith.truncf %25 : vector<128x512xf32> to vector<128x512xbf16>
    %cst_11 = arith.constant dense<0.000000e+00> : vector<8x512xf32>
    %35 = tpu.matmul %32, %34, %cst_11 {dimension_numbers = #tpu.dot_dimension_numbers<[1], [0], [0], [1], [0, 0, 1, 1], [], []>} : vector<8x128xbf16>, vector<128x512xbf16>, vector<8x512xf32> -> vector<8x512xf32>
    %36 = arith.addf %33, %35 : vector<8x512xf32>
    %c0_12 = arith.constant 0 : index
    %c0_13 = arith.constant 0 : index
    %37 = vector.load %arg9[%c0_12, %c0_13] : memref<8x512xf32, #tpu.memory_space<vmem>>, vector<8x512xf32>
    tpu.vector_store %arg9[%c0_12, %c0_13], %36 {strides = array<i32>} : memref<8x512xf32, #tpu.memory_space<vmem>>, vector<8x512xf32>,
    %c0_i32_14 = arith.constant 0 : i32
    %38 = arith.cmpi eq, %arg1, %c0_i32_14 : i32
    %39 = arith.extui %38 : i1 to i32
    %c0_i32_15 = arith.constant 0 : i32
    %40 = arith.cmpi ne, %39, %c0_i32_15 : i32
    scf.if %40 {
      %c0_16 = arith.constant 0 : index
      %c0_17 = arith.constant 0 : index
      %41 = vector.load %arg9[%c0_16, %c0_17] : memref<8x512xf32, #tpu.memory_space<vmem>>, vector<8x512xf32>
      %c0_18 = arith.constant 0 : index
      %c0_19 = arith.constant 0 : index
      %42 = vector.load %arg6[%c0_18, %c0_19] : memref<512x64xf32, #tpu.memory_space<vmem>>, vector<512x64xf32>
      %cst_20 = arith.constant dense<0.000000e+00> : vector<8x64xf32>
      %43 = tpu.matmul %41, %42, %cst_20 {dimension_numbers = #tpu.dot_dimension_numbers<[1], [0], [0], [1], [0, 0, 1, 1], [], []>} : vector<8x512xf32>, vector<512x64xf32>, vector<8x64xf32> -> vector<8x64xf32>
      %c0_21 = arith.constant 0 : index
      %c0_22 = arith.constant 0 : index
      %44 = vector.load %arg7[%c0_21, %c0_22] : memref<1x64xf32, #tpu.memory_space<vmem>>, vector<1x64xf32>
      %45 = vector.broadcast %44 : vector<1x64xf32> to vector<8x64xf32>
      %46 = arith.addf %43, %45 : vector<8x64xf32>
      %cst_23 = arith.constant 0.000000e+00 : f32
      %47 = vector.broadcast %cst_23 : f32 to vector<8x64xf32>
      %48 = arith.maximumf %46, %47 : vector<8x64xf32>
      %c0_24 = arith.constant 0 : index
      %c0_25 = arith.constant 0 : index
      %c0_26 = arith.constant 0 : index
      %49 = vector.load %arg8[%c0_24, %c0_25, %c0_26] : memref<1x8x64xf32, #tpu.memory_space<vmem>>, vector<1x8x64xf32>
      %50 = vector.shape_cast %49 : vector<1x8x64xf32> to vector<8x64xf32>
      %51 = vector.shape_cast %48 : vector<8x64xf32> to vector<1x8x64xf32>
      tpu.vector_store %arg8[%c0_24, %c0_25, %c0_26], %51 {strides = array<i32>} : memref<1x8x64xf32, #tpu.memory_space<vmem>>, vector<1x8x64xf32>,
    } else {
    }
    return
  }
  func.func @transform_0(%arg0: i32, %arg1: i32) -> (i32, i32) {
    %c1_i32 = arith.constant 1 : i32
    %0 = arith.muli %arg0, %c1_i32 : i32
    %1 = arith.addi %0, %arg1 : i32
    %c0_i32 = arith.constant 0 : i32
    %c0_i32_0 = arith.constant 0 : i32
    return %1, %c0_i32 : i32, i32
  }
  func.func @transform_1(%arg0: i32, %arg1: i32) -> (i32, i32) {
    %c1_i32 = arith.constant 1 : i32
    %0 = arith.muli %arg0, %c1_i32 : i32
    %1 = arith.addi %0, %arg1 : i32
    %c0_i32 = arith.constant 0 : i32
    %c0_i32_0 = arith.constant 0 : i32
    return %c0_i32, %1 : i32, i32
  }
  func.func @transform_2(%arg0: i32, %arg1: i32) -> (i32, i32) {
    %c1_i32 = arith.constant 1 : i32
    %0 = arith.muli %arg0, %c1_i32 : i32
    %1 = arith.addi %0, %arg1 : i32
    %c0_i32 = arith.constant 0 : i32
    %c0_i32_0 = arith.constant 0 : i32
    return %1, %c0_i32 : i32, i32
  }
  func.func @transform_3(%arg0: i32, %arg1: i32) -> (i32, i32) {
    %c0_i32 = arith.constant 0 : i32
    %c0_i32_0 = arith.constant 0 : i32
    %c0_i32_1 = arith.constant 0 : i32
    return %c0_i32, %c0_i32_0 : i32, i32
  }
  func.func @transform_4(%arg0: i32, %arg1: i32) -> (i32, i32) {
    %c0_i32 = arith.constant 0 : i32
    %c0_i32_0 = arith.constant 0 : i32
    %c0_i32_1 = arith.constant 0 : i32
    return %c0_i32, %c0_i32_0 : i32, i32
  }
  func.func @transform_5(%arg0: i32, %arg1: i32) -> (i32, i32) {
    %c0_i32 = arith.constant 0 : i32
    %c0_i32_0 = arith.constant 0 : i32
    %c0_i32_1 = arith.constant 0 : i32
    return %c0_i32, %c0_i32_0 : i32, i32
  }
  func.func @transform_6(%arg0: i32, %arg1: i32) -> (i32, i32, i32) {
    %c0_i32 = arith.constant 0 : i32
    %c0_i32_0 = arith.constant 0 : i32
    %c0_i32_1 = arith.constant 0 : i32
    return %arg0, %c0_i32, %c0_i32_0 : i32, i32, i32
  }
}

</mosaic_0001>

<llo_original>
// kernel: tpu_custom_call.1
$region0: #{tpu_custom_call.1}
  #allocation0 [shape = 'u32[]', space=smem, size = 0x4, offset = 0x4, fixed_abs, tag = 'smem constant byte address 0x4 - core index']
  #allocation1 [shape = 'u32[144,128]{1,0:T(1,128)}', space=vmem, size = 0x12000, scoped, tag = 'internal scratch']
  #allocation2 [shape = 'f32[8,512]{1,0:T(8,128)}', space=vmem, size = 0x4000, scoped, tag = 'scratch operand']
  %s0 = inlined_call_operand.vmem [shape: s32[12,1], index: 0, kind: input, shape index: {}]
  %s1 = inlined_call_operand.vmem [shape: s32[1,12], index: 1, kind: input, shape index: {}]
  %s2 = inlined_call_operand.vmem [shape: f32[12,512], index: 2, kind: input, shape index: {}]
  %s3 = inlined_call_operand.vmem [shape: bf16[8,512], index: 3, kind: input, shape index: {}]
  %s4 = inlined_call_operand.vmem [shape: f32[512,64], index: 4, kind: input, shape index: {}]
  %s5 = inlined_call_operand.vmem [shape: f32[1,64], index: 5, kind: input, shape index: {}]
  %s6 = inlined_call_operand.hbm [shape: f32[1,8,64], index: 6, kind: output, shape index: {}]
  %s7 = sld [smem:[#allocation0]]
  $region42: #{tpu_custom_call.1} parent=0
    _
  %s9 = ssub.s32 1, %s7
  %s10 = scalar_select 0, %s9, %s7
  $region1: #{tpu_custom_call.1} parent=0
    #allocation3 [shape = 'u8[4096]{0}', space=vmem, size = 0x1000, scoped, tag = 'output window, operand 0, single buffered']
    #allocation4 [shape = 's32[1]{0}', space=sflag, size = 0x4, scoped, tag = 'scoped memory for tpu_custom_call.1']
    %11 = vsyncpa [#allocation4], 0
    // Predicated region
    $region2: #{tpu_custom_call.1} parent=1 // pred_check
      _
    $region3: #{tpu_custom_call.1} parent=1 // pred_check_branch
      %13 = sbr.rel (0) target = $region5
    $region4: #{tpu_custom_call.1} parent=1 // pred_region
      %s14 = sadd.s32 0, 0
      %s15 = smul.u32 16, %s14
      %s16 = ssub.s32 2, %s15
      %s17 = smul.u32 128, %s16
      %p18 = scmp.lt.s32.totalorder %s15, 1
      %s19 = scalar_select %p18, %s15, 1
      %s20 = smul.addr %s19, 8
      %s21 = scalar_lea.vmem %s0, %s20
      %s22 = sadd.s32 0, 0
      %s23 = smul.u32 16, %s22
      %s24 = ssub.s32 2, %s23
      %s25 = smul.u32 128, %s24
    $region5: #{tpu_custom_call.1} parent=1 // pred_fallthru
      _
    // Predicated region
    $region6: #{tpu_custom_call.1} parent=1 // pred_check
      _
    $region7: #{tpu_custom_call.1} parent=1 // pred_check_branch
      %27 = sbr.rel (0) target = $region9
    $region8: #{tpu_custom_call.1} parent=1 // pred_region
      %s28 = sadd.s32 0, 0
      %p29 = scmp.lt.s32.totalorder %s28, 0
      %s30 = scalar_select %p29, %s28, 0
      %s31 = scalar_lea.vmem %s1, %s30
      %s32 = sadd.s32 0, 0
    $region9: #{tpu_custom_call.1} parent=1 // pred_fallthru
      _
    // Predicated region
    $region10: #{tpu_custom_call.1} parent=1 // pred_check
      _
    $region11: #{tpu_custom_call.1} parent=1 // pred_check_branch
      %34 = sbr.rel (0) target = $region13
    $region12: #{tpu_custom_call.1} parent=1 // pred_region
      %s35 = sadd.s32 0, 0
      %s36 = smul.u32 16, %s35
      %s37 = ssub.s32 2, %s36
      %s38 = smul.u32 128, %s37
      %s39 = smul.u32 %s38, 4
      %p40 = scmp.lt.s32.totalorder %s36, 1
      %s41 = scalar_select %p40, %s36, 1
      %s42 = smul.addr %s41, 4
      %s43 = smul.addr %s42, 8
      %s44 = scalar_lea.vmem %s2, %s43
      %s45 = sadd.s32 0, 0
      %s46 = smul.u32 16, %s45
      %s47 = ssub.s32 2, %s46
      %s48 = smul.u32 128, %s47
      %s49 = smul.u32 %s48, 4
    $region13: #{tpu_custom_call.1} parent=1 // pred_fallthru
      _
    // Predicated region
    $region14: #{tpu_custom_call.1} parent=1 // pred_check
      _
    $region15: #{tpu_custom_call.1} parent=1 // pred_check_branch
      %51 = sbr.rel (0) target = $region17
    $region16: #{tpu_custom_call.1} parent=1 // pred_region
      _
    $region17: #{tpu_custom_call.1} parent=1 // pred_fallthru
      _
    // Predicated region
    $region18: #{tpu_custom_call.1} parent=1 // pred_check
      _
    $region19: #{tpu_custom_call.1} parent=1 // pred_check_branch
      %53 = sbr.rel (0) target = $region21
    $region20: #{tpu_custom_call.1} parent=1 // pred_region
      _
    $region21: #{tpu_custom_call.1} parent=1 // pred_fallthru
      _
    // Predicated region
    $region22: #{tpu_custom_call.1} parent=1 // pred_check
      _
    $region23: #{tpu_custom_call.1} parent=1 // pred_check_branch
      %55 = sbr.rel (0) target = $region25
    $region24: #{tpu_custom_call.1} parent=1 // pred_region
      _
    $region25: #{tpu_custom_call.1} parent=1 // pred_fallthru
      _
    %s56 = sadd.s32 0, 0
    %s57 = smul.u32 16, %s56
    %s58 = ssub.s32 2, %s57
    %s59 = smul.u32 128, %s58
    %p60 = scmp.lt.s32.totalorder %s57, 1
    %s61 = scalar_select %p60, %s57, 1
    %s62 = smul.addr %s61, 8
    %s63 = scalar_lea.vmem %s0, %s62
    %s64 = sadd.s32 0, 0
    %p65 = scmp.lt.s32.totalorder %s64, 0
    %s66 = scalar_select %p65, %s64, 0
    %s67 = scalar_lea.vmem %s1, %s66
    %s68 = sadd.s32 0, 0
    %s69 = smul.u32 16, %s68
    %s70 = ssub.s32 2, %s69
    %s71 = smul.u32 128, %s70
    %s72 = smul.u32 %s71, 4
    %p73 = scmp.lt.s32.totalorder %s69, 1
    %s74 = scalar_select %p73, %s69, 1
    %s75 = smul.addr %s74, 4
    %s76 = smul.addr %s75, 8
    %s77 = scalar_lea.vmem %s2, %s76
    %s78 = sadd.s32 0, 0
    %s79 = smul.u32 16, %s78
    %s80 = ssub.s32 2, %s79
    %s81 = smul.u32 128, %s80
    %p82 = scmp.lt.s32.totalorder %s79, 1
    %s83 = scalar_select %p82, %s79, 1
    %s84 = smul.addr %s83, 8
    %s85 = scalar_lea.vmem %s0, %s84
    %s86 = sadd.s32 0, 0
    %s87 = smul.u32 16, %s86
    %s88 = ssub.s32 2, %s87
    %s89 = smul.u32 128, %s88
    %s90 = sadd.s32 0, 0
    %p91 = scmp.lt.s32.totalorder %s90, 0
    %s92 = scalar_select %p91, %s90, 0
    %s93 = scalar_lea.vmem %s1, %s92
    %s94 = sadd.s32 0, 0
    %s95 = sadd.s32 0, 0
    %s96 = smul.u32 16, %s95
    %s97 = ssub.s32 2, %s96
    %s98 = smul.u32 128, %s97
    %s99 = smul.u32 %s98, 4
    %p100 = scmp.lt.s32.totalorder %s96, 1
    %s101 = scalar_select %p100, %s96, 1
    %s102 = smul.addr %s101, 4
    %s103 = smul.addr %s102, 8
    %s104 = scalar_lea.vmem %s2, %s103
    %s105 = sadd.s32 0, 0
    %s106 = smul.u32 16, %s105
    %s107 = ssub.s32 2, %s106
    %s108 = smul.u32 128, %s107
    %s109 = smul.u32 %s108, 4
    %p111 = scmp.eq.s32.totalorder 0, 0
    // Predicated region
    $region26: #{tpu_custom_call.1} parent=1 // pred_check
      %p112 = pneg %p111
    $region27: #{tpu_custom_call.1} parent=1 // pred_check_branch
      %114 = sbr.rel (%p112) target = $region29
    $region28: #{tpu_custom_call.1} parent=1 // pred_region
      %115 = vst [vmem:[#allocation2] sm:$0xff] 0.0
      %116 = vst [vmem:[#allocation2 + $0x8] sm:$0xff] 0.0
      %117 = vst [vmem:[#allocation2 + $0x10] sm:$0xff] 0.0
      %118 = vst [vmem:[#allocation2 + $0x18] sm:$0xff] 0.0
    $region29: #{tpu_custom_call.1} parent=1 // pred_fallthru
      _
    %v119 = vlaneseq
    %v120 = vand.u32 %v119, 127
    %v121 = vld [vmem:[%s85] sm:$0xff]
    %v122 = vld [vmem:[%s85 + $0x8] sm:$0xff]
    %v123 = vld [vmem:[%s85 + $0x10] sm:$0xff]
    %v124 = vld [vmem:[%s85 + $0x18] sm:$0xff]
    %v125 = vld [vmem:[%s85 + $0x20] sm:$0xff]
    %v126 = vld [vmem:[%s85 + $0x28] sm:$0xff]
    %v127 = vld [vmem:[%s85 + $0x30] sm:$0xff]
    %v128 = vld [vmem:[%s85 + $0x38] sm:$0xff]
    %v129 = vld [vmem:[%s85 + $0x40] sm:$0xff]
    %v130 = vld [vmem:[%s85 + $0x48] sm:$0xff]
    %v131 = vld [vmem:[%s85 + $0x50] sm:$0xff]
    %v132 = vld [vmem:[%s85 + $0x58] sm:$0xff]
    %v133 = vld [vmem:[%s85 + $0x60] sm:$0xff]
    %v134 = vld [vmem:[%s85 + $0x68] sm:$0xff]
    %v135 = vld [vmem:[%s85 + $0x70] sm:$0xff]
    %v136 = vld [vmem:[%s85 + $0x78] sm:$0xff]
    %137 = vset.pattern.permute.xlu0 0
    %138 = vperm.xlu0 %137, %v121
    %v139 = vpop.permute.xlu0 %138
    %140 = vset.pattern.permute.xlu0 0
    %141 = vperm.xlu0 %140, %v122
    %v142 = vpop.permute.xlu0 %141
    %143 = vset.pattern.permute.xlu0 0
    %144 = vperm.xlu0 %143, %v123
    %v145 = vpop.permute.xlu0 %144
    %146 = vset.pattern.permute.xlu0 0
    %147 = vperm.xlu0 %146, %v124
    %v148 = vpop.permute.xlu0 %147
    %149 = vset.pattern.permute.xlu0 0
    %150 = vperm.xlu0 %149, %v125
    %v151 = vpop.permute.xlu0 %150
    %152 = vset.pattern.permute.xlu0 0
    %153 = vperm.xlu0 %152, %v126
    %v154 = vpop.permute.xlu0 %153
    %155 = vset.pattern.permute.xlu0 0
    %156 = vperm.xlu0 %155, %v127
    %v157 = vpop.permute.xlu0 %156
    %158 = vset.pattern.permute.xlu0 0
    %159 = vperm.xlu0 %158, %v128
    %v160 = vpop.permute.xlu0 %159
    %161 = vset.pattern.permute.xlu0 0
    %162 = vperm.xlu0 %161, %v129
    %v163 = vpop.permute.xlu0 %162
    %164 = vset.pattern.permute.xlu0 0
    %165 = vperm.xlu0 %164, %v130
    %v166 = vpop.permute.xlu0 %165
    %167 = vset.pattern.permute.xlu0 0
    %168 = vperm.xlu0 %167, %v131
    %v169 = vpop.permute.xlu0 %168
    %170 = vset.pattern.permute.xlu0 0
    %171 = vperm.xlu0 %170, %v132
    %v172 = vpop.permute.xlu0 %171
    %173 = vset.pattern.permute.xlu0 0
    %174 = vperm.xlu0 %173, %v133
    %v175 = vpop.permute.xlu0 %174
    %176 = vset.pattern.permute.xlu0 0
    %177 = vperm.xlu0 %176, %v134
    %v178 = vpop.permute.xlu0 %177
    %179 = vset.pattern.permute.xlu0 0
    %180 = vperm.xlu0 %179, %v135
    %v181 = vpop.permute.xlu0 %180
    %182 = vset.pattern.permute.xlu0 0
    %183 = vperm.xlu0 %182, %v136
    %v184 = vpop.permute.xlu0 %183
    %vm185 = vcmp.eq.s32.totalorder %v120, %v139
    %vm186 = vcmp.eq.s32.totalorder %v120, %v142
    %vm187 = vcmp.eq.s32.totalorder %v120, %v145
    %vm188 = vcmp.eq.s32.totalorder %v120, %v148
    %vm189 = vcmp.eq.s32.totalorder %v120, %v151
    %vm190 = vcmp.eq.s32.totalorder %v120, %v154
    %vm191 = vcmp.eq.s32.totalorder %v120, %v157
    %vm192 = vcmp.eq.s32.totalorder %v120, %v160
    %vm193 = vcmp.eq.s32.totalorder %v120, %v163
    %vm194 = vcmp.eq.s32.totalorder %v120, %v166
    %vm195 = vcmp.eq.s32.totalorder %v120, %v169
    %vm196 = vcmp.eq.s32.totalorder %v120, %v172
    %vm197 = vcmp.eq.s32.totalorder %v120, %v175
    %vm198 = vcmp.eq.s32.totalorder %v120, %v178
    %vm199 = vcmp.eq.s32.totalorder %v120, %v181
    %vm200 = vcmp.eq.s32.totalorder %v120, %v184
    %v201 = vsel %vm185, 1, 0
    %v202 = vsel %vm186, 1, 0
    %v203 = vsel %vm187, 1, 0
    %v204 = vsel %vm188, 1, 0
    %v205 = vsel %vm189, 1, 0
    %v206 = vsel %vm190, 1, 0
    %v207 = vsel %vm191, 1, 0
    %v208 = vsel %vm192, 1, 0
    %v209 = vsel %vm193, 1, 0
    %v210 = vsel %vm194, 1, 0
    %v211 = vsel %vm195, 1, 0
    %v212 = vsel %vm196, 1, 0
    %v213 = vsel %vm197, 1, 0
    %v214 = vsel %vm198, 1, 0
    %v215 = vsel %vm199, 1, 0
    %v216 = vsel %vm200, 1, 0
    %v217 = vcvt.s32.f32 %v201
    %v218 = vcvt.s32.f32 %v202
    %v219 = vcvt.s32.f32 %v203
    %v220 = vcvt.s32.f32 %v204
    %v221 = vcvt.s32.f32 %v205
    %v222 = vcvt.s32.f32 %v206
    %v223 = vcvt.s32.f32 %v207
    %v224 = vcvt.s32.f32 %v208
    %v225 = vcvt.s32.f32 %v209
    %v226 = vcvt.s32.f32 %v210
    %v227 = vcvt.s32.f32 %v211
    %v228 = vcvt.s32.f32 %v212
    %v229 = vcvt.s32.f32 %v213
    %v230 = vcvt.s32.f32 %v214
    %v231 = vcvt.s32.f32 %v215
    %v232 = vcvt.s32.f32 %v216
    %v233 = vpack.c.bf16 %v218, %v217
    %v234 = vpack.c.bf16 %v220, %v219
    %v235 = vpack.c.bf16 %v222, %v221
    %v236 = vpack.c.bf16 %v224, %v223
    %v237 = vpack.c.bf16 %v226, %v225
    %v238 = vpack.c.bf16 %v228, %v227
    %v239 = vpack.c.bf16 %v230, %v229
    %v240 = vpack.c.bf16 %v232, %v231
    %v241 = vld [vmem:[%s3] sm:$0xff]
    %v242 = vld [vmem:[%s3 + $0x8] sm:$0xff]
    %v245 = vunpack.c.l.b16 %v241
    %v246 = vunpack.c.h.b16 %v241
    %v247 = vunpack.c.l.b16 %v242
    %v248 = vunpack.c.h.b16 %v242
    %v249 = vpack.c.b16 %v245, %v245
    %v250 = vpack.c.b16 %v246, %v246
    %v251 = vpack.c.b16 %v247, %v247
    %v252 = vpack.c.b16 %v248, %v248
    %vm253 = vcmask 64512
    %v255 = vsel %vm253, %v233, 0
    %v258 = vsel %vm253, %v234, 0
    %v261 = vsel %vm253, %v235, 0
    %v264 = vsel %vm253, %v236, 0
    %v267 = vsel %vm253, %v237, 0
    %v270 = vsel %vm253, %v238, 0
    %v273 = vsel %vm253, %v239, 0
    %v276 = vsel %vm253, %v240, 0
    %vm278 = vcmask 1043456
    %v280 = vsel %vm278, %v249, 0
    %v283 = vsel %vm278, %v250, 0
    %v286 = vsel %vm278, %v251, 0
    %v289 = vsel %vm278, %v252, 0
    %291 = vmatprep.subr.bf16.mxu0 %v283
    %292 = vmatpush1.bf16.msra.mxu0 %v280
    %293 = vmatprep.subr.bf16.mxu0 0
    %294 = vmatpush1.bf16.msra.mxu0 0
    %295 = vmatprep.subr.bf16.mxu0 0
    %296 = vmatpush1.bf16.msra.mxu0 0
    %297 = vmatprep.subr.bf16.mxu0 0
    %298 = vmatpush1.bf16.msra.mxu0 0
    %299 = vmatprep.subr.bf16.mxu0 0
    %300 = vmatpush1.bf16.msra.mxu0 0
    %301 = vmatprep.subr.bf16.mxu0 0
    %302 = vmatpush1.bf16.msra.mxu0 0
    %303 = vmatprep.subr.bf16.mxu0 0
    %304 = vmatpush1.bf16.msra.mxu0 0
    %305 = vmatprep.subr.bf16.mxu0 0
    %306 = vmatpush1.bf16.msra.mxu0 0
    %307 = vmatprep.subr.bf16.mxu0 0
    %308 = vmatpush1.bf16.msra.mxu0 0
    %309 = vmatprep.subr.bf16.mxu0 0
    %310 = vmatpush1.bf16.msra.mxu0 0
    %311 = vmatprep.subr.bf16.mxu0 0
    %312 = vmatpush1.bf16.msra.mxu0 0
    %313 = vmatprep.subr.bf16.mxu0 0
    %314 = vmatpush1.bf16.msra.mxu0 0
    %315 = vmatprep.subr.bf16.mxu0 0
    %316 = vmatpush1.bf16.msra.mxu0 0
    %317 = vmatprep.subr.bf16.mxu0 0
    %318 = vmatpush1.bf16.msra.mxu0 0
    %319 = vmatprep.subr.bf16.mxu0 0
    %320 = vmatpush1.bf16.msra.mxu0 0
    %321 = vmatprep.subr.bf16.mxu0 0
    %322 = vmatpush1.bf16.msra.mxu0 0
    %323 = vmatprep.mubr.bf16.mxu0 0
    %324 = vmatmul.mubr.bf16.gmra.mrb[0].mxu0 %v255
    %v325 = vpop.f32.mrb[0].mxu0
    %v326 = vadd.f32 0.0, %v325
    %v327 = vpop.f32.mrb[0].mxu0
    %v328 = vadd.f32 0.0, %v327
    %v329 = vpop.f32.mrb[0].mxu0
    %v330 = vadd.f32 0.0, %v329
    %v331 = vpop.f32.mrb[0].mxu0
    %v332 = vadd.f32 0.0, %v331
    %333 = vmatprep.mubr.bf16.mxu0 0
    %334 = vmatmul.mubr.bf16.gmra.mrb[0].mxu0 %v258
    %v335 = vpop.f32.mrb[0].mxu0
    %v336 = vadd.f32 0.0, %v335
    %v337 = vpop.f32.mrb[0].mxu0
    %v338 = vadd.f32 0.0, %v337
    %v339 = vpop.f32.mrb[0].mxu0
    %v340 = vadd.f32 0.0, %v339
    %v341 = vpop.f32.mrb[0].mxu0
    %v342 = vadd.f32 0.0, %v341
    %343 = vmatprep.mubr.bf16.mxu0 0
    %344 = vmatmul.mubr.bf16.gmra.mrb[0].mxu0 %v261
    %v345 = vpop.f32.mrb[0].mxu0
    %v346 = vadd.f32 0.0, %v345
    %v347 = vpop.f32.mrb[0].mxu0
    %v348 = vadd.f32 0.0, %v347
    %v349 = vpop.f32.mrb[0].mxu0
    %v350 = vadd.f32 0.0, %v349
    %v351 = vpop.f32.mrb[0].mxu0
    %v352 = vadd.f32 0.0, %v351
    %353 = vmatprep.mubr.bf16.mxu0 0
    %354 = vmatmul.mubr.bf16.gmra.mrb[0].mxu0 %v264
    %v355 = vpop.f32.mrb[0].mxu0
    %v356 = vadd.f32 0.0, %v355
    %v357 = vpop.f32.mrb[0].mxu0
    %v358 = vadd.f32 0.0, %v357
    %v359 = vpop.f32.mrb[0].mxu0
    %v360 = vadd.f32 0.0, %v359
    %v361 = vpop.f32.mrb[0].mxu0
    %v362 = vadd.f32 0.0, %v361
    %363 = vmatprep.mubr.bf16.mxu0 0
    %364 = vmatmul.mubr.bf16.gmra.mrb[0].mxu0 %v267
    %v365 = vpop.f32.mrb[0].mxu0
    %v366 = vadd.f32 0.0, %v365
    %v367 = vpop.f32.mrb[0].mxu0
    %v368 = vadd.f32 0.0, %v367
    %v369 = vpop.f32.mrb[0].mxu0
    %v370 = vadd.f32 0.0, %v369
    %v371 = vpop.f32.mrb[0].mxu0
    %v372 = vadd.f32 0.0, %v371
    %373 = vmatprep.mubr.bf16.mxu0 0
    %374 = vmatmul.mubr.bf16.gmra.mrb[0].mxu0 %v270
    %v375 = vpop.f32.mrb[0].mxu0
    %v376 = vadd.f32 0.0, %v375
    %v377 = vpop.f32.mrb[0].mxu0
    %v378 = vadd.f32 0.0, %v377
    %v379 = vpop.f32.mrb[0].mxu0
    %v380 = vadd.f32 0.0, %v379
    %v381 = vpop.f32.mrb[0].mxu0
    %v382 = vadd.f32 0.0, %v381
    %383 = vmatprep.mubr.bf16.mxu0 0
    %384 = vmatmul.mubr.bf16.gmra.mrb[0].mxu0 %v273
    %v385 = vpop.f32.mrb[0].mxu0
    %v386 = vadd.f32 0.0, %v385
    %v387 = vpop.f32.mrb[0].mxu0
    %v388 = vadd.f32 0.0, %v387
    %v389 = vpop.f32.mrb[0].mxu0
    %v390 = vadd.f32 0.0, %v389
    %v391 = vpop.f32.mrb[0].mxu0
    %v392 = vadd.f32 0.0, %v391
    %393 = vmatprep.mubr.bf16.mxu0 0
    %394 = vmatmul.mubr.bf16.gmra.mrb[0].mxu0 %v276
    %v395 = vpop.f32.mrb[0].mxu0
    %v396 = vadd.f32 0.0, %v395
    %v397 = vpop.f32.mrb[0].mxu0
    %v398 = vadd.f32 0.0, %v397
    %v399 = vpop.f32.mrb[0].mxu0
    %v400 = vadd.f32 0.0, %v399
    %v401 = vpop.f32.mrb[0].mxu0
    %v402 = vadd.f32 0.0, %v401
    %403 = vdwg.mxu0
    %404 = vmatprep.subr.bf16.mxu0 %v289
    %405 = vmatpush1.bf16.msra.mxu0 %v286
    %406 = vmatprep.subr.bf16.mxu0 0
    %407 = vmatpush1.bf16.msra.mxu0 0
    %408 = vmatprep.subr.bf16.mxu0 0
    %409 = vmatpush1.bf16.msra.mxu0 0
    %410 = vmatprep.subr.bf16.mxu0 0
    %411 = vmatpush1.bf16.msra.mxu0 0
    %412 = vmatprep.subr.bf16.mxu0 0
    %413 = vmatpush1.bf16.msra.mxu0 0
    %414 = vmatprep.subr.bf16.mxu0 0
    %415 = vmatpush1.bf16.msra.mxu0 0
    %416 = vmatprep.subr.bf16.mxu0 0
    %417 = vmatpush1.bf16.msra.mxu0 0
    %418 = vmatprep.subr.bf16.mxu0 0
    %419 = vmatpush1.bf16.msra.mxu0 0
    %420 = vmatprep.subr.bf16.mxu0 0
    %421 = vmatpush1.bf16.msra.mxu0 0
    %422 = vmatprep.subr.bf16.mxu0 0
    %423 = vmatpush1.bf16.msra.mxu0 0
    %424 = vmatprep.subr.bf16.mxu0 0
    %425 = vmatpush1.bf16.msra.mxu0 0
    %426 = vmatprep.subr.bf16.mxu0 0
    %427 = vmatpush1.bf16.msra.mxu0 0
    %428 = vmatprep.subr.bf16.mxu0 0
    %429 = vmatpush1.bf16.msra.mxu0 0
    %430 = vmatprep.subr.bf16.mxu0 0
    %431 = vmatpush1.bf16.msra.mxu0 0
    %432 = vmatprep.subr.bf16.mxu0 0
    %433 = vmatpush1.bf16.msra.mxu0 0
    %434 = vmatprep.subr.bf16.mxu0 0
    %435 = vmatpush1.bf16.msra.mxu0 0
    %436 = vmatprep.mubr.bf16.mxu0 0
    %437 = vmatmul.mubr.bf16.gmra.mrb[0].mxu0 %v255
    %v438 = vpop.f32.mrb[0].mxu0
    %v439 = vadd.f32 0.0, %v438
    %v440 = vpop.f32.mrb[0].mxu0
    %v441 = vadd.f32 0.0, %v440
    %v442 = vpop.f32.mrb[0].mxu0
    %v443 = vadd.f32 0.0, %v442
    %v444 = vpop.f32.mrb[0].mxu0
    %v445 = vadd.f32 0.0, %v444
    %446 = vmatprep.mubr.bf16.mxu0 0
    %447 = vmatmul.mubr.bf16.gmra.mrb[0].mxu0 %v258
    %v448 = vpop.f32.mrb[0].mxu0
    %v449 = vadd.f32 0.0, %v448
    %v450 = vpop.f32.mrb[0].mxu0
    %v451 = vadd.f32 0.0, %v450
    %v452 = vpop.f32.mrb[0].mxu0
    %v453 = vadd.f32 0.0, %v452
    %v454 = vpop.f32.mrb[0].mxu0
    %v455 = vadd.f32 0.0, %v454
    %456 = vmatprep.mubr.bf16.mxu0 0
    %457 = vmatmul.mubr.bf16.gmra.mrb[0].mxu0 %v261
    %v458 = vpop.f32.mrb[0].mxu0
    %v459 = vadd.f32 0.0, %v458
    %v460 = vpop.f32.mrb[0].mxu0
    %v461 = vadd.f32 0.0, %v460
    %v462 = vpop.f32.mrb[0].mxu0
    %v463 = vadd.f32 0.0, %v462
    %v464 = vpop.f32.mrb[0].mxu0
    %v465 = vadd.f32 0.0, %v464
    %466 = vmatprep.mubr.bf16.mxu0 0
    %467 = vmatmul.mubr.bf16.gmra.mrb[0].mxu0 %v264
    %v468 = vpop.f32.mrb[0].mxu0
    %v469 = vadd.f32 0.0, %v468
    %v470 = vpop.f32.mrb[0].mxu0
    %v471 = vadd.f32 0.0, %v470
    %v472 = vpop.f32.mrb[0].mxu0
    %v473 = vadd.f32 0.0, %v472
    %v474 = vpop.f32.mrb[0].mxu0
    %v475 = vadd.f32 0.0, %v474
    %476 = vmatprep.mubr.bf16.mxu0 0
    %477 = vmatmul.mubr.bf16.gmra.mrb[0].mxu0 %v267
    %v478 = vpop.f32.mrb[0].mxu0
    %v479 = vadd.f32 0.0, %v478
    %v480 = vpop.f32.mrb[0].mxu0
    %v481 = vadd.f32 0.0, %v480
    %v482 = vpop.f32.mrb[0].mxu0
    %v483 = vadd.f32 0.0, %v482
    %v484 = vpop.f32.mrb[0].mxu0
    %v485 = vadd.f32 0.0, %v484
    %486 = vmatprep.mubr.bf16.mxu0 0
    %487 = vmatmul.mubr.bf16.gmra.mrb[0].mxu0 %v270
    %v488 = vpop.f32.mrb[0].mxu0
    %v489 = vadd.f32 0.0, %v488
    %v490 = vpop.f32.mrb[0].mxu0
    %v491 = vadd.f32 0.0, %v490
    %v492 = vpop.f32.mrb[0].mxu0
    %v493 = vadd.f32 0.0, %v492
    %v494 = vpop.f32.mrb[0].mxu0
    %v495 = vadd.f32 0.0, %v494
    %496 = vmatprep.mubr.bf16.mxu0 0
    %497 = vmatmul.mubr.bf16.gmra.mrb[0].mxu0 %v273
    %v498 = vpop.f32.mrb[0].mxu0
    %v499 = vadd.f32 0.0, %v498
    %v500 = vpop.f32.mrb[0].mxu0
    %v501 = vadd.f32 0.0, %v500
    %v502 = vpop.f32.mrb[0].mxu0
    %v503 = vadd.f32 0.0, %v502
    %v504 = vpop.f32.mrb[0].mxu0
    %v505 = vadd.f32 0.0, %v504
    %506 = vmatprep.mubr.bf16.mxu0 0
    %507 = vmatmul.mubr.bf16.gmra.mrb[0].mxu0 %v276
    %v508 = vpop.f32.mrb[0].mxu0
    %v509 = vadd.f32 0.0, %v508
    %v510 = vpop.f32.mrb[0].mxu0
    %v511 = vadd.f32 0.0, %v510
    %v512 = vpop.f32.mrb[0].mxu0
    %v513 = vadd.f32 0.0, %v512
    %v514 = vpop.f32.mrb[0].mxu0
    %v515 = vadd.f32 0.0, %v514
    %516 = vdwg.mxu0
    %v517 = vld [vmem:[%s104] sm:$0xff]
    %v518 = vld [vmem:[%s104 + $0x8] sm:$0xff]
    %v519 = vld [vmem:[%s104 + $0x10] sm:$0xff]
    %v520 = vld [vmem:[%s104 + $0x18] sm:$0xff]
    %v521 = vld [vmem:[%s104 + $0x20] sm:$0xff]
    %v522 = vld [vmem:[%s104 + $0x28] sm:$0xff]
    %v523 = vld [vmem:[%s104 + $0x30] sm:$0xff]
    %v524 = vld [vmem:[%s104 + $0x38] sm:$0xff]
    %v525 = vld [vmem:[%s104 + $0x40] sm:$0xff]
    %v526 = vld [vmem:[%s104 + $0x48] sm:$0xff]
    %v527 = vld [vmem:[%s104 + $0x50] sm:$0xff]
    %v528 = vld [vmem:[%s104 + $0x58] sm:$0xff]
    %v529 = vld [vmem:[%s104 + $0x60] sm:$0xff]
    %v530 = vld [vmem:[%s104 + $0x68] sm:$0xff]
    %v531 = vld [vmem:[%s104 + $0x70] sm:$0xff]
    %v532 = vld [vmem:[%s104 + $0x78] sm:$0xff]
    %v533 = vld [vmem:[%s104 + $0x80] sm:$0xff]
    %v534 = vld [vmem:[%s104 + $0x88] sm:$0xff]
    %v535 = vld [vmem:[%s104 + $0x90] sm:$0xff]
    %v536 = vld [vmem:[%s104 + $0x98] sm:$0xff]
    %v537 = vld [vmem:[%s104 + $0xa0] sm:$0xff]
    %v538 = vld [vmem:[%s104 + $0xa8] sm:$0xff]
    %v539 = vld [vmem:[%s104 + $0xb0] sm:$0xff]
    %v540 = vld [vmem:[%s104 + $0xb8] sm:$0xff]
    %v541 = vld [vmem:[%s104 + $0xc0] sm:$0xff]
    %v542 = vld [vmem:[%s104 + $0xc8] sm:$0xff]
    %v543 = vld [vmem:[%s104 + $0xd0] sm:$0xff]
    %v544 = vld [vmem:[%s104 + $0xd8] sm:$0xff]
    %v545 = vld [vmem:[%s104 + $0xe0] sm:$0xff]
    %v546 = vld [vmem:[%s104 + $0xe8] sm:$0xff]
    %v547 = vld [vmem:[%s104 + $0xf0] sm:$0xff]
    %v548 = vld [vmem:[%s104 + $0xf8] sm:$0xff]
    %v549 = vld [vmem:[%s104 + $0x100] sm:$0xff]
    %v550 = vld [vmem:[%s104 + $0x108] sm:$0xff]
    %v551 = vld [vmem:[%s104 + $0x110] sm:$0xff]
    %v552 = vld [vmem:[%s104 + $0x118] sm:$0xff]
    %v553 = vld [vmem:[%s104 + $0x120] sm:$0xff]
    %v554 = vld [vmem:[%s104 + $0x128] sm:$0xff]
    %v555 = vld [vmem:[%s104 + $0x130] sm:$0xff]
    %v556 = vld [vmem:[%s104 + $0x138] sm:$0xff]
    %v557 = vld [vmem:[%s104 + $0x140] sm:$0xff]
    %v558 = vld [vmem:[%s104 + $0x148] sm:$0xff]
    %v559 = vld [vmem:[%s104 + $0x150] sm:$0xff]
    %v560 = vld [vmem:[%s104 + $0x158] sm:$0xff]
    %v561 = vld [vmem:[%s104 + $0x160] sm:$0xff]
    %v562 = vld [vmem:[%s104 + $0x168] sm:$0xff]
    %v563 = vld [vmem:[%s104 + $0x170] sm:$0xff]
    %v564 = vld [vmem:[%s104 + $0x178] sm:$0xff]
    %v565 = vld [vmem:[%s104 + $0x180] sm:$0xff]
    %v566 = vld [vmem:[%s104 + $0x188] sm:$0xff]
    %v567 = vld [vmem:[%s104 + $0x190] sm:$0xff]
    %v568 = vld [vmem:[%s104 + $0x198] sm:$0xff]
    %v569 = vld [vmem:[%s104 + $0x1a0] sm:$0xff]
    %v570 = vld [vmem:[%s104 + $0x1a8] sm:$0xff]
    %v571 = vld [vmem:[%s104 + $0x1b0] sm:$0xff]
    %v572 = vld [vmem:[%s104 + $0x1b8] sm:$0xff]
    %v573 = vld [vmem:[%s104 + $0x1c0] sm:$0xff]
    %v574 = vld [vmem:[%s104 + $0x1c8] sm:$0xff]
    %v575 = vld [vmem:[%s104 + $0x1d0] sm:$0xff]
    %v576 = vld [vmem:[%s104 + $0x1d8] sm:$0xff]
    %v577 = vld [vmem:[%s104 + $0x1e0] sm:$0xff]
    %v578 = vld [vmem:[%s104 + $0x1e8] sm:$0xff]
    %v579 = vld [vmem:[%s104 + $0x1f0] sm:$0xff]
    %v580 = vld [vmem:[%s104 + $0x1f8] sm:$0xff]
    %v581 = vmul.f32 %v326, %v517
    %v582 = vmul.f32 %v328, %v518
    %v583 = vmul.f32 %v439, %v519
    %v584 = vmul.f32 %v441, %v520
    %v585 = vmul.f32 %v330, %v521
    %v586 = vmul.f32 %v332, %v522
    %v587 = vmul.f32 %v443, %v523
    %v588 = vmul.f32 %v445, %v524
    %v589 = vmul.f32 %v336, %v525
    %v590 = vmul.f32 %v338, %v526
    %v591 = vmul.f32 %v449, %v527
    %v592 = vmul.f32 %v451, %v528
    %v593 = vmul.f32 %v340, %v529
    %v594 = vmul.f32 %v342, %v530
    %v595 = vmul.f32 %v453, %v531
    %v596 = vmul.f32 %v455, %v532
    %v597 = vmul.f32 %v346, %v533
    %v598 = vmul.f32 %v348, %v534
    %v599 = vmul.f32 %v459, %v535
    %v600 = vmul.f32 %v461, %v536
    %v601 = vmul.f32 %v350, %v537
    %v602 = vmul.f32 %v352, %v538
    %v603 = vmul.f32 %v463, %v539
    %v604 = vmul.f32 %v465, %v540
    %v605 = vmul.f32 %v356, %v541
    %v606 = vmul.f32 %v358, %v542
    %v607 = vmul.f32 %v469, %v543
    %v608 = vmul.f32 %v471, %v544
    %v609 = vmul.f32 %v360, %v545
    %v610 = vmul.f32 %v362, %v546
    %v611 = vmul.f32 %v473, %v547
    %v612 = vmul.f32 %v475, %v548
    %v613 = vmul.f32 %v366, %v549
    %v614 = vmul.f32 %v368, %v550
    %v615 = vmul.f32 %v479, %v551
    %v616 = vmul.f32 %v481, %v552
    %v617 = vmul.f32 %v370, %v553
    %v618 = vmul.f32 %v372, %v554
    %v619 = vmul.f32 %v483, %v555
    %v620 = vmul.f32 %v485, %v556
    %v621 = vmul.f32 %v376, %v557
    %v622 = vmul.f32 %v378, %v558
    %v623 = vmul.f32 %v489, %v559
    %v624 = vmul.f32 %v491, %v560
    %v625 = vmul.f32 %v380, %v561
    %v626 = vmul.f32 %v382, %v562
    %v627 = vmul.f32 %v493, %v563
    %v628 = vmul.f32 %v495, %v564
    %v629 = vmul.f32 %v386, %v565
    %v630 = vmul.f32 %v388, %v566
    %v631 = vmul.f32 %v499, %v567
    %v632 = vmul.f32 %v501, %v568
    %v633 = vmul.f32 %v390, %v569
    %v634 = vmul.f32 %v392, %v570
    %v635 = vmul.f32 %v503, %v571
    %v636 = vmul.f32 %v505, %v572
    %v637 = vmul.f32 %v396, %v573
    %v638 = vmul.f32 %v398, %v574
    %v639 = vmul.f32 %v509, %v575
    %v640 = vmul.f32 %v511, %v576
    %v641 = vmul.f32 %v400, %v577
    %v642 = vmul.f32 %v402, %v578
    %v643 = vmul.f32 %v513, %v579
    %v644 = vmul.f32 %v515, %v580
    %s645 = sadd.s32 0, 0
    %s646 = smul.u32 %s645, 128
    %v647 = vlaneseq
    %v648 = vshrl.u32 %v647, 7
    %v649 = vadd.s32 %v648, 8
    %v650 = vadd.s32 %v648, 16
    %v651 = vadd.s32 %v648, 24
    %v652 = vadd.s32 %v648, 32
    %v653 = vadd.s32 %v648, 40
    %v654 = vadd.s32 %v648, 48
    %v655 = vadd.s32 %v648, 56
    %v656 = vadd.s32 %v648, 64
    %v657 = vadd.s32 %v648, 72
    %v658 = vadd.s32 %v648, 80
    %v659 = vadd.s32 %v648, 88
    %v660 = vadd.s32 %v648, 96
    %v661 = vadd.s32 %v648, 104
    %v662 = vadd.s32 %v648, 112
    %v663 = vadd.s32 %v648, 120
    %v664 = vstv %s646
    %v665 = vadd.s32 %v664, %v648
    %v666 = vadd.s32 %v664, %v649
    %v667 = vadd.s32 %v664, %v650
    %v668 = vadd.s32 %v664, %v651
    %v669 = vadd.s32 %v664, %v652
    %v670 = vadd.s32 %v664, %v653
    %v671 = vadd.s32 %v664, %v654
    %v672 = vadd.s32 %v664, %v655
    %v673 = vadd.s32 %v664, %v656
    %v674 = vadd.s32 %v664, %v657
    %v675 = vadd.s32 %v664, %v658
    %v676 = vadd.s32 %v664, %v659
    %v677 = vadd.s32 %v664, %v660
    %v678 = vadd.s32 %v664, %v661
    %v679 = vadd.s32 %v664, %v662
    %v680 = vadd.s32 %v664, %v663
    %vm681 = vcmp.lt.s32.totalorder %v665, 12
    %vm682 = vcmp.lt.s32.totalorder %v666, 12
    %vm683 = vcmp.lt.s32.totalorder %v667, 12
    %vm684 = vcmp.lt.s32.totalorder %v668, 12
    %vm685 = vcmp.lt.s32.totalorder %v669, 12
    %vm686 = vcmp.lt.s32.totalorder %v670, 12
    %vm687 = vcmp.lt.s32.totalorder %v671, 12
    %vm688 = vcmp.lt.s32.totalorder %v672, 12
    %vm689 = vcmp.lt.s32.totalorder %v673, 12
    %vm690 = vcmp.lt.s32.totalorder %v674, 12
    %vm691 = vcmp.lt.s32.totalorder %v675, 12
    %vm692 = vcmp.lt.s32.totalorder %v676, 12
    %vm693 = vcmp.lt.s32.totalorder %v677, 12
    %vm694 = vcmp.lt.s32.totalorder %v678, 12
    %vm695 = vcmp.lt.s32.totalorder %v679, 12
    %vm696 = vcmp.lt.s32.totalorder %v680, 12
    %v697 = vsel %vm681, 1, 0
    %v698 = vsel %vm682, 1, 0
    %v699 = vsel %vm683, 1, 0
    %v700 = vsel %vm684, 1, 0
    %v701 = vsel %vm685, 1, 0
    %v702 = vsel %vm686, 1, 0
    %v703 = vsel %vm687, 1, 0
    %v704 = vsel %vm688, 1, 0
    %v705 = vsel %vm689, 1, 0
    %v706 = vsel %vm690, 1, 0
    %v707 = vsel %vm691, 1, 0
    %v708 = vsel %vm692, 1, 0
    %v709 = vsel %vm693, 1, 0
    %v710 = vsel %vm694, 1, 0
    %v711 = vsel %vm695, 1, 0
    %v712 = vsel %vm696, 1, 0
    %vm713 = vcmp.eq.s32.totalorder %v697, 1
    %vm714 = vcmp.eq.s32.totalorder %v698, 1
    %vm715 = vcmp.eq.s32.totalorder %v699, 1
    %vm716 = vcmp.eq.s32.totalorder %v700, 1
    %vm717 = vcmp.eq.s32.totalorder %v701, 1
    %vm718 = vcmp.eq.s32.totalorder %v702, 1
    %vm719 = vcmp.eq.s32.totalorder %v703, 1
    %vm720 = vcmp.eq.s32.totalorder %v704, 1
    %vm721 = vcmp.eq.s32.totalorder %v705, 1
    %vm722 = vcmp.eq.s32.totalorder %v706, 1
    %vm723 = vcmp.eq.s32.totalorder %v707, 1
    %vm724 = vcmp.eq.s32.totalorder %v708, 1
    %vm725 = vcmp.eq.s32.totalorder %v709, 1
    %vm726 = vcmp.eq.s32.totalorder %v710, 1
    %vm727 = vcmp.eq.s32.totalorder %v711, 1
    %vm728 = vcmp.eq.s32.totalorder %v712, 1
    %v729 = vsel %vm713, %v581, 0.0
    %v730 = vsel %vm713, %v582, 0.0
    %v731 = vsel %vm713, %v583, 0.0
    %v732 = vsel %vm713, %v584, 0.0
    %v733 = vsel %vm714, %v585, 0.0
    %v734 = vsel %vm714, %v586, 0.0
    %v735 = vsel %vm714, %v587, 0.0
    %v736 = vsel %vm714, %v588, 0.0
    %v737 = vsel %vm715, %v589, 0.0
    %v738 = vsel %vm715, %v590, 0.0
    %v739 = vsel %vm715, %v591, 0.0
    %v740 = vsel %vm715, %v592, 0.0
    %v741 = vsel %vm716, %v593, 0.0
    %v742 = vsel %vm716, %v594, 0.0
    %v743 = vsel %vm716, %v595, 0.0
    %v744 = vsel %vm716, %v596, 0.0
    %v745 = vsel %vm717, %v597, 0.0
    %v746 = vsel %vm717, %v598, 0.0
    %v747 = vsel %vm717, %v599, 0.0
    %v748 = vsel %vm717, %v600, 0.0
    %v749 = vsel %vm718, %v601, 0.0
    %v750 = vsel %vm718, %v602, 0.0
    %v751 = vsel %vm718, %v603, 0.0
    %v752 = vsel %vm718, %v604, 0.0
    %v753 = vsel %vm719, %v605, 0.0
    %v754 = vsel %vm719, %v606, 0.0
    %v755 = vsel %vm719, %v607, 0.0
    %v756 = vsel %vm719, %v608, 0.0
    %v757 = vsel %vm720, %v609, 0.0
    %v758 = vsel %vm720, %v610, 0.0
    %v759 = vsel %vm720, %v611, 0.0
    %v760 = vsel %vm720, %v612, 0.0
    %v761 = vsel %vm721, %v613, 0.0
    %v762 = vsel %vm721, %v614, 0.0
    %v763 = vsel %vm721, %v615, 0.0
    %v764 = vsel %vm721, %v616, 0.0
    %v765 = vsel %vm722, %v617, 0.0
    %v766 = vsel %vm722, %v618, 0.0
    %v767 = vsel %vm722, %v619, 0.0
    %v768 = vsel %vm722, %v620, 0.0
    %v769 = vsel %vm723, %v621, 0.0
    %v770 = vsel %vm723, %v622, 0.0
    %v771 = vsel %vm723, %v623, 0.0
    %v772 = vsel %vm723, %v624, 0.0
    %v773 = vsel %vm724, %v625, 0.0
    %v774 = vsel %vm724, %v626, 0.0
    %v775 = vsel %vm724, %v627, 0.0
    %v776 = vsel %vm724, %v628, 0.0
    %v777 = vsel %vm725, %v629, 0.0
    %v778 = vsel %vm725, %v630, 0.0
    %v779 = vsel %vm725, %v631, 0.0
    %v780 = vsel %vm725, %v632, 0.0
    %v781 = vsel %vm726, %v633, 0.0
    %v782 = vsel %vm726, %v634, 0.0
    %v783 = vsel %vm726, %v635, 0.0
    %v784 = vsel %vm726, %v636, 0.0
    %v785 = vsel %vm727, %v637, 0.0
    %v786 = vsel %vm727, %v638, 0.0
    %v787 = vsel %vm727, %v639, 0.0
    %v788 = vsel %vm727, %v640, 0.0
    %v789 = vsel %vm728, %v641, 0.0
    %v790 = vsel %vm728, %v642, 0.0
    %v791 = vsel %vm728, %v643, 0.0
    %v792 = vsel %vm728, %v644, 0.0
    %v793 = vld [vmem:[%s93] sm:$0x1]
    %v794 = vlaneseq
    %v795 = vshrl.u32 %v794, 7
    %v796 = vsub.s32 0, %v795
    %v797 = vrot.slane %v793, %v796
    %vm798 = vcmp.eq.s32.totalorder %v648, %v797
    %v799 = vsel %vm798, 1, 0
    %v800 = vcvt.s32.f32 %v799
    %v801 = vpack.c.bf16 %v800, %v800
    %v802 = vld [vmem:[#allocation2] sm:$0xff]
    %v803 = vld [vmem:[#allocation2 + $0x8] sm:$0xff]
    %v804 = vld [vmem:[#allocation2 + $0x10] sm:$0xff]
    %v805 = vld [vmem:[#allocation2 + $0x18] sm:$0xff]
    %v806 = vpack.c.bf16 %v733, %v729
    %v807 = vpack.c.bf16 %v734, %v730
    %v808 = vpack.c.bf16 %v735, %v731
    %v809 = vpack.c.bf16 %v736, %v732
    %v810 = vpack.c.bf16 %v741, %v737
    %v811 = vpack.c.bf16 %v742, %v738
    %v812 = vpack.c.bf16 %v743, %v739
    %v813 = vpack.c.bf16 %v744, %v740
    %v814 = vpack.c.bf16 %v749, %v745
    %v815 = vpack.c.bf16 %v750, %v746
    %v816 = vpack.c.bf16 %v751, %v747
    %v817 = vpack.c.bf16 %v752, %v748
    %v818 = vpack.c.bf16 %v757, %v753
    %v819 = vpack.c.bf16 %v758, %v754
    %v820 = vpack.c.bf16 %v759, %v755
    %v821 = vpack.c.bf16 %v760, %v756
    %v822 = vpack.c.bf16 %v765, %v761
    %v823 = vpack.c.bf16 %v766, %v762
    %v824 = vpack.c.bf16 %v767, %v763
    %v825 = vpack.c.bf16 %v768, %v764
    %v826 = vpack.c.bf16 %v773, %v769
    %v827 = vpack.c.bf16 %v774, %v770
    %v828 = vpack.c.bf16 %v775, %v771
    %v829 = vpack.c.bf16 %v776, %v772
    %v830 = vpack.c.bf16 %v781, %v777
    %v831 = vpack.c.bf16 %v782, %v778
    %v832 = vpack.c.bf16 %v783, %v779
    %v833 = vpack.c.bf16 %v784, %v780
    %v834 = vpack.c.bf16 %v789, %v785
    %v835 = vpack.c.bf16 %v790, %v786
    %v836 = vpack.c.bf16 %v791, %v787
    %v837 = vpack.c.bf16 %v792, %v788
    %838 = vmatprep.subr.bf16.mxu0 %v807
    %839 = vmatpush1.bf16.msra.mxu0 %v806
    %840 = vmatprep.subr.bf16.mxu0 %v811
    %841 = vmatpush1.bf16.msra.mxu0 %v810
    %842 = vmatprep.subr.bf16.mxu0 %v815
    %843 = vmatpush1.bf16.msra.mxu0 %v814
    %844 = vmatprep.subr.bf16.mxu0 %v819
    %845 = vmatpush1.bf16.msra.mxu0 %v818
    %846 = vmatprep.subr.bf16.mxu0 %v823
    %847 = vmatpush1.bf16.msra.mxu0 %v822
    %848 = vmatprep.subr.bf16.mxu0 %v827
    %849 = vmatpush1.bf16.msra.mxu0 %v826
    %850 = vmatprep.subr.bf16.mxu0 %v831
    %851 = vmatpush1.bf16.msra.mxu0 %v830
    %852 = vmatprep.subr.bf16.mxu0 %v835
    %853 = vmatpush1.bf16.msra.mxu0 %v834
    %854 = vmatprep.subr.bf16.mxu0 0
    %855 = vmatpush1.bf16.msra.mxu0 0
    %856 = vmatprep.subr.bf16.mxu0 0
    %857 = vmatpush1.bf16.msra.mxu0 0
    %858 = vmatprep.subr.bf16.mxu0 0
    %859 = vmatpush1.bf16.msra.mxu0 0
    %860 = vmatprep.subr.bf16.mxu0 0
    %861 = vmatpush1.bf16.msra.mxu0 0
    %862 = vmatprep.subr.bf16.mxu0 0
    %863 = vmatpush1.bf16.msra.mxu0 0
    %864 = vmatprep.subr.bf16.mxu0 0
    %865 = vmatpush1.bf16.msra.mxu0 0
    %866 = vmatprep.subr.bf16.mxu0 0
    %867 = vmatpush1.bf16.msra.mxu0 0
    %868 = vmatprep.subr.bf16.mxu0 0
    %869 = vmatpush1.bf16.msra.mxu0 0
    %870 = vmatprep.mubr.bf16.mxu0 0
    %871 = vmatmul.mubr.bf16.gmra.mrb[0].mxu0 %v801
    %v872 = vpop.f32.mrb[0].mxu0
    %v873 = vadd.f32 0.0, %v872
    %v874 = vpop.f32.mrb[0].mxu0
    %v875 = vadd.f32 0.0, %v874
    %v876 = vpop.f32.mrb[0].mxu0
    %v877 = vpop.f32.mrb[0].mxu0
    %878 = vdwg.mxu0
    %879 = vmatprep.subr.bf16.mxu0 %v809
    %880 = vmatpush1.bf16.msra.mxu0 %v808
    %881 = vmatprep.subr.bf16.mxu0 %v813
    %882 = vmatpush1.bf16.msra.mxu0 %v812
    %883 = vmatprep.subr.bf16.mxu0 %v817
    %884 = vmatpush1.bf16.msra.mxu0 %v816
    %885 = vmatprep.subr.bf16.mxu0 %v821
    %886 = vmatpush1.bf16.msra.mxu0 %v820
    %887 = vmatprep.subr.bf16.mxu0 %v825
    %888 = vmatpush1.bf16.msra.mxu0 %v824
    %889 = vmatprep.subr.bf16.mxu0 %v829
    %890 = vmatpush1.bf16.msra.mxu0 %v828
    %891 = vmatprep.subr.bf16.mxu0 %v833
    %892 = vmatpush1.bf16.msra.mxu0 %v832
    %893 = vmatprep.subr.bf16.mxu0 %v837
    %894 = vmatpush1.bf16.msra.mxu0 %v836
    %895 = vmatprep.subr.bf16.mxu0 0
    %896 = vmatpush1.bf16.msra.mxu0 0
    %897 = vmatprep.subr.bf16.mxu0 0
    %898 = vmatpush1.bf16.msra.mxu0 0
    %899 = vmatprep.subr.bf16.mxu0 0
    %900 = vmatpush1.bf16.msra.mxu0 0
    %901 = vmatprep.subr.bf16.mxu0 0
    %902 = vmatpush1.bf16.msra.mxu0 0
    %903 = vmatprep.subr.bf16.mxu0 0
    %904 = vmatpush1.bf16.msra.mxu0 0
    %905 = vmatprep.subr.bf16.mxu0 0
    %906 = vmatpush1.bf16.msra.mxu0 0
    %907 = vmatprep.subr.bf16.mxu0 0
    %908 = vmatpush1.bf16.msra.mxu0 0
    %909 = vmatprep.subr.bf16.mxu0 0
    %910 = vmatpush1.bf16.msra.mxu0 0
    %911 = vmatprep.mubr.bf16.mxu0 0
    %912 = vmatmul.mubr.bf16.gmra.mrb[0].mxu0 %v801
    %v913 = vpop.f32.mrb[0].mxu0
    %v914 = vadd.f32 0.0, %v913
    %v915 = vpop.f32.mrb[0].mxu0
    %v916 = vadd.f32 0.0, %v915
    %v917 = vpop.f32.mrb[0].mxu0
    %v918 = vpop.f32.mrb[0].mxu0
    %919 = vdwg.mxu0
    %v920 = vadd.f32 %v802, %v873
    %v921 = vadd.f32 %v803, %v875
    %v922 = vadd.f32 %v804, %v914
    %v923 = vadd.f32 %v805, %v916
    %924 = vst [vmem:[#allocation2] sm:$0xff] %v920
    %925 = vst [vmem:[#allocation2 + $0x8] sm:$0xff] %v921
    %926 = vst [vmem:[#allocation2 + $0x10] sm:$0xff] %v922
    %927 = vst [vmem:[#allocation2 + $0x18] sm:$0xff] %v923
    // Predicated region
    $region30: #{tpu_custom_call.1} parent=1 // pred_check
      %p928 = pneg %p111
    $region31: #{tpu_custom_call.1} parent=1 // pred_check_branch
      %930 = sbr.rel (%p928) target = $region33
    $region32: #{tpu_custom_call.1} parent=1 // pred_region
      %v931 = vld [vmem:[#allocation2] sm:$0xff]
      %v932 = vld [vmem:[#allocation2 + $0x8] sm:$0xff]
      %v933 = vld [vmem:[#allocation2 + $0x10] sm:$0xff]
      %v934 = vld [vmem:[#allocation2 + $0x18] sm:$0xff]
      %v935 = vld [vmem:[%s4] sm:$0xff]
      %v936 = vld [vmem:[%s4 + $0x8] sm:$0xff]
      %v937 = vld [vmem:[%s4 + $0x10] sm:$0xff]
      %v938 = vld [vmem:[%s4 + $0x18] sm:$0xff]
      %v939 = vld [vmem:[%s4 + $0x20] sm:$0xff]
      %v940 = vld [vmem:[%s4 + $0x28] sm:$0xff]
      %v941 = vld [vmem:[%s4 + $0x30] sm:$0xff]
      %v942 = vld [vmem:[%s4 + $0x38] sm:$0xff]
      %v943 = vld [vmem:[%s4 + $0x40] sm:$0xff]
      %v944 = vld [vmem:[%s4 + $0x48] sm:$0xff]
      %v945 = vld [vmem:[%s4 + $0x50] sm:$0xff]
      %v946 = vld [vmem:[%s4 + $0x58] sm:$0xff]
      %v947 = vld [vmem:[%s4 + $0x60] sm:$0xff]
      %v948 = vld [vmem:[%s4 + $0x68] sm:$0xff]
      %v949 = vld [vmem:[%s4 + $0x70] sm:$0xff]
      %v950 = vld [vmem:[%s4 + $0x78] sm:$0xff]
      %v951 = vld [vmem:[%s4 + $0x80] sm:$0xff]
      %v952 = vld [vmem:[%s4 + $0x88] sm:$0xff]
      %v953 = vld [vmem:[%s4 + $0x90] sm:$0xff]
      %v954 = vld [vmem:[%s4 + $0x98] sm:$0xff]
      %v955 = vld [vmem:[%s4 + $0xa0] sm:$0xff]
      %v956 = vld [vmem:[%s4 + $0xa8] sm:$0xff]
      %v957 = vld [vmem:[%s4 + $0xb0] sm:$0xff]
      %v958 = vld [vmem:[%s4 + $0xb8] sm:$0xff]
      %v959 = vld [vmem:[%s4 + $0xc0] sm:$0xff]
      %v960 = vld [vmem:[%s4 + $0xc8] sm:$0xff]
      %v961 = vld [vmem:[%s4 + $0xd0] sm:$0xff]
      %v962 = vld [vmem:[%s4 + $0xd8] sm:$0xff]
      %v963 = vld [vmem:[%s4 + $0xe0] sm:$0xff]
      %v964 = vld [vmem:[%s4 + $0xe8] sm:$0xff]
      %v965 = vld [vmem:[%s4 + $0xf0] sm:$0xff]
      %v966 = vld [vmem:[%s4 + $0xf8] sm:$0xff]
      %v967 = vld [vmem:[%s4 + $0x100] sm:$0xff]
      %v968 = vld [vmem:[%s4 + $0x108] sm:$0xff]
      %v969 = vld [vmem:[%s4 + $0x110] sm:$0xff]
      %v970 = vld [vmem:[%s4 + $0x118] sm:$0xff]
      %v971 = vld [vmem:[%s4 + $0x120] sm:$0xff]
      %v972 = vld [vmem:[%s4 + $0x128] sm:$0xff]
      %v973 = vld [vmem:[%s4 + $0x130] sm:$0xff]
      %v974 = vld [vmem:[%s4 + $0x138] sm:$0xff]
      %v975 = vld [vmem:[%s4 + $0x140] sm:$0xff]
      %v976 = vld [vmem:[%s4 + $0x148] sm:$0xff]
      %v977 = vld [vmem:[%s4 + $0x150] sm:$0xff]
      %v978 = vld [vmem:[%s4 + $0x158] sm:$0xff]
      %v979 = vld [vmem:[%s4 + $0x160] sm:$0xff]
      %v980 = vld [vmem:[%s4 + $0x168] sm:$0xff]
      %v981 = vld [vmem:[%s4 + $0x170] sm:$0xff]
      %v982 = vld [vmem:[%s4 + $0x178] sm:$0xff]
      %v983 = vld [vmem:[%s4 + $0x180] sm:$0xff]
      %v984 = vld [vmem:[%s4 + $0x188] sm:$0xff]
      %v985 = vld [vmem:[%s4 + $0x190] sm:$0xff]
      %v986 = vld [vmem:[%s4 + $0x198] sm:$0xff]
      %v987 = vld [vmem:[%s4 + $0x1a0] sm:$0xff]
      %v988 = vld [vmem:[%s4 + $0x1a8] sm:$0xff]
      %v989 = vld [vmem:[%s4 + $0x1b0] sm:$0xff]
      %v990 = vld [vmem:[%s4 + $0x1b8] sm:$0xff]
      %v991 = vld [vmem:[%s4 + $0x1c0] sm:$0xff]
      %v992 = vld [vmem:[%s4 + $0x1c8] sm:$0xff]
      %v993 = vld [vmem:[%s4 + $0x1d0] sm:$0xff]
      %v994 = vld [vmem:[%s4 + $0x1d8] sm:$0xff]
      %v995 = vld [vmem:[%s4 + $0x1e0] sm:$0xff]
      %v996 = vld [vmem:[%s4 + $0x1e8] sm:$0xff]
      %v997 = vld [vmem:[%s4 + $0x1f0] sm:$0xff]
      %v998 = vld [vmem:[%s4 + $0x1f8] sm:$0xff]
      %v999 = vld [vmem:[%s5] sm:$0x1]
      %v1001 = vlaneseq
      %v1002 = vshrl.u32 %v1001, 7
      %v1003 = vsub.s32 0, %v1002
      %v1004 = vrot.slane %v999, %v1003
      %1006 = vmatprep.subr.mxu0 0.0
      %1007 = vmatpush1.msra.mxu0 %v935
      %1008 = vmatprep.subr.mxu0 0.0
      %1009 = vmatpush1.msra.mxu0 %v936
      %1010 = vmatprep.subr.mxu0 0.0
      %1011 = vmatpush1.msra.mxu0 %v937
      %1012 = vmatprep.subr.mxu0 0.0
      %1013 = vmatpush1.msra.mxu0 %v938
      %1014 = vmatprep.subr.mxu0 0.0
      %1015 = vmatpush1.msra.mxu0 %v939
      %1016 = vmatprep.subr.mxu0 0.0
      %1017 = vmatpush1.msra.mxu0 %v940
      %1018 = vmatprep.subr.mxu0 0.0
      %1019 = vmatpush1.msra.mxu0 %v941
      %1020 = vmatprep.subr.mxu0 0.0
      %1021 = vmatpush1.msra.mxu0 %v942
      %1022 = vmatprep.subr.mxu0 0.0
      %1023 = vmatpush1.msra.mxu0 %v943
      %1024 = vmatprep.subr.mxu0 0.0
      %1025 = vmatpush1.msra.mxu0 %v944
      %1026 = vmatprep.subr.mxu0 0.0
      %1027 = vmatpush1.msra.mxu0 %v945
      %1028 = vmatprep.subr.mxu0 0.0
      %1029 = vmatpush1.msra.mxu0 %v946
      %1030 = vmatprep.subr.mxu0 0.0
      %1031 = vmatpush1.msra.mxu0 %v947
      %1032 = vmatprep.subr.mxu0 0.0
      %1033 = vmatpush1.msra.mxu0 %v948
      %1034 = vmatprep.subr.mxu0 0.0
      %1035 = vmatpush1.msra.mxu0 %v949
      %1036 = vmatprep.subr.mxu0 0.0
      %1037 = vmatpush1.msra.mxu0 %v950
      %1038 = vmatprep.subr.mxu0 0.0
      %1039 = vmatpush1.msra.mxu0 %v951
      %1040 = vmatprep.subr.mxu0 0.0
      %1041 = vmatpush1.msra.mxu0 %v952
      %1042 = vmatprep.subr.mxu0 0.0
      %1043 = vmatpush1.msra.mxu0 %v953
      %1044 = vmatprep.subr.mxu0 0.0
      %1045 = vmatpush1.msra.mxu0 %v954
      %1046 = vmatprep.subr.mxu0 0.0
      %1047 = vmatpush1.msra.mxu0 %v955
      %1048 = vmatprep.subr.mxu0 0.0
      %1049 = vmatpush1.msra.mxu0 %v956
      %1050 = vmatprep.subr.mxu0 0.0
      %1051 = vmatpush1.msra.mxu0 %v957
      %1052 = vmatprep.subr.mxu0 0.0
      %1053 = vmatpush1.msra.mxu0 %v958
      %1054 = vmatprep.subr.mxu0 0.0
      %1055 = vmatpush1.msra.mxu0 %v959
      %1056 = vmatprep.subr.mxu0 0.0
      %1057 = vmatpush1.msra.mxu0 %v960
      %1058 = vmatprep.subr.mxu0 0.0
      %1059 = vmatpush1.msra.mxu0 %v961
      %1060 = vmatprep.subr.mxu0 0.0
      %1061 = vmatpush1.msra.mxu0 %v962
      %1062 = vmatprep.subr.mxu0 0.0
      %1063 = vmatpush1.msra.mxu0 %v963
      %1064 = vmatprep.subr.mxu0 0.0
      %1065 = vmatpush1.msra.mxu0 %v964
      %1066 = vmatprep.subr.mxu0 0.0
      %1067 = vmatpush1.msra.mxu0 %v965
      %1068 = vmatprep.subr.mxu0 0.0
      %1069 = vmatpush1.msra.mxu0 %v966
      %1070 = vmatprep.mubr.f32.mxu0 %v932
      %1071 = vmatmul.mubr.f32.gmra.mrb[0].mxu0 %v931
      %v1072 = vpop.f32.mrb[0].mxu0
      %v1073 = vadd.f32 %v1004, %v1072
      %v1074 = vpop.f32.mrb[0].mxu0
      %1075 = vdwg.mxu0
      %1076 = vmatprep.subr.mxu0 0.0
      %1077 = vmatpush1.msra.mxu0 %v967
      %1078 = vmatprep.subr.mxu0 0.0
      %1079 = vmatpush1.msra.mxu0 %v968
      %1080 = vmatprep.subr.mxu0 0.0
      %1081 = vmatpush1.msra.mxu0 %v969
      %1082 = vmatprep.subr.mxu0 0.0
      %1083 = vmatpush1.msra.mxu0 %v970
      %1084 = vmatprep.subr.mxu0 0.0
      %1085 = vmatpush1.msra.mxu0 %v971
      %1086 = vmatprep.subr.mxu0 0.0
      %1087 = vmatpush1.msra.mxu0 %v972
      %1088 = vmatprep.subr.mxu0 0.0
      %1089 = vmatpush1.msra.mxu0 %v973
      %1090 = vmatprep.subr.mxu0 0.0
      %1091 = vmatpush1.msra.mxu0 %v974
      %1092 = vmatprep.subr.mxu0 0.0
      %1093 = vmatpush1.msra.mxu0 %v975
      %1094 = vmatprep.subr.mxu0 0.0
      %1095 = vmatpush1.msra.mxu0 %v976
      %1096 = vmatprep.subr.mxu0 0.0
      %1097 = vmatpush1.msra.mxu0 %v977
      %1098 = vmatprep.subr.mxu0 0.0
      %1099 = vmatpush1.msra.mxu0 %v978
      %1100 = vmatprep.subr.mxu0 0.0
      %1101 = vmatpush1.msra.mxu0 %v979
      %1102 = vmatprep.subr.mxu0 0.0
      %1103 = vmatpush1.msra.mxu0 %v980
      %1104 = vmatprep.subr.mxu0 0.0
      %1105 = vmatpush1.msra.mxu0 %v981
      %1106 = vmatprep.subr.mxu0 0.0
      %1107 = vmatpush1.msra.mxu0 %v982
      %1108 = vmatprep.subr.mxu0 0.0
      %1109 = vmatpush1.msra.mxu0 %v983
      %1110 = vmatprep.subr.mxu0 0.0
      %1111 = vmatpush1.msra.mxu0 %v984
      %1112 = vmatprep.subr.mxu0 0.0
      %1113 = vmatpush1.msra.mxu0 %v985
      %1114 = vmatprep.subr.mxu0 0.0
      %1115 = vmatpush1.msra.mxu0 %v986
      %1116 = vmatprep.subr.mxu0 0.0
      %1117 = vmatpush1.msra.mxu0 %v987
      %1118 = vmatprep.subr.mxu0 0.0
      %1119 = vmatpush1.msra.mxu0 %v988
      %1120 = vmatprep.subr.mxu0 0.0
      %1121 = vmatpush1.msra.mxu0 %v989
      %1122 = vmatprep.subr.mxu0 0.0
      %1123 = vmatpush1.msra.mxu0 %v990
      %1124 = vmatprep.subr.mxu0 0.0
      %1125 = vmatpush1.msra.mxu0 %v991
      %1126 = vmatprep.subr.mxu0 0.0
      %1127 = vmatpush1.msra.mxu0 %v992
      %1128 = vmatprep.subr.mxu0 0.0
      %1129 = vmatpush1.msra.mxu0 %v993
      %1130 = vmatprep.subr.mxu0 0.0
      %1131 = vmatpush1.msra.mxu0 %v994
      %1132 = vmatprep.subr.mxu0 0.0
      %1133 = vmatpush1.msra.mxu0 %v995
      %1134 = vmatprep.subr.mxu0 0.0
      %1135 = vmatpush1.msra.mxu0 %v996
      %1136 = vmatprep.subr.mxu0 0.0
      %1137 = vmatpush1.msra.mxu0 %v997
      %1138 = vmatprep.subr.mxu0 0.0
      %1139 = vmatpush1.msra.mxu0 %v998
      %1140 = vmatprep.mubr.f32.mxu0 %v934
      %1141 = vmatmul.mubr.f32.gmra.mrb[0].mxu0 %v933
      %v1142 = vpop.f32.mrb[0].mxu0
      %v1143 = vadd.f32 %v1073, %v1142
      %v1144 = vpop.f32.mrb[0].mxu0
      %1145 = vdwg.mxu0
      %v1146 = vmax.f32 %v1143, 0.0
      %vm1147 = vcmask 523264
      %1148 = vst.msk [vmem:[#allocation3] sm:$0xff] %vm1147, %v1146
    $region33: #{tpu_custom_call.1} parent=1 // pred_fallthru
      _
    // Predicated region
    $region34: #{tpu_custom_call.1} parent=1 // pred_check
      _
    $region35: #{tpu_custom_call.1} parent=1 // pred_check_branch
      %1150 = sbr.rel (0) target = $region37
    $region36: #{tpu_custom_call.1} parent=1 // pred_region
      %s1152 = ssub.s32 128, 128
      %1153 = vsyncadd [#allocation4], %s1152
      %s1155 = sshll.u32 [#allocation3], 4
      %s1156 = int_to_ptr.vmem [resolvable:$true] %s1155
      %1158 = dma.vmem_to_hbm [thread:$0]  %s1156, 128, %s6, [#allocation4]
    $region37: #{tpu_custom_call.1} parent=1 // pred_fallthru
      _
    // Predicated region
    $region38: #{tpu_custom_call.1} parent=1 // pred_check
      _
    $region39: #{tpu_custom_call.1} parent=1 // pred_check_branch
      %1160 = sbr.rel (0) target = $region41
    $region40: #{tpu_custom_call.1} parent=1 // pred_region
      %1161 = dma.done [#allocation4], 128
    $region41: #{tpu_custom_call.1} parent=1 // pred_fallthru
      _
    %1162 = vsyncpa [#allocation4], 1

</llo_original>
